<compile_context>
chip_gen: v7x
topology: tpu7x:2x2x1
jax: 0.10.0
libtpu: 0.0.40
codegen_flags: <defaults>
</compile_context>

<pallas_src>
import functools

import jax
import jax.numpy as jnp
from jax import lax
from jax.experimental import pallas as pl
from jax.experimental.pallas import tpu as pltpu


def _round_up(x, m):
    return ((x + m - 1) // m) * m


def _physical_vmem_bytes():
    try:
        info = pltpu.get_tpu_info()
        cap = getattr(info, "vmem_capacity_bytes", None)
        if cap:
            return int(cap)
    except Exception:
        pass
    return 64 * 1024 * 1024  # conservative (v7x per-TensorCore)


def _triplet_kernel(margin, n, x_ref, tcol_ref, trow_ref, o_ref, gram_acc):
    k = pl.program_id(0)

    # ---- init accumulator on first K slab ----
    @pl.when(k == 0)
    def _():
        gram_acc[...] = jnp.zeros_like(gram_acc)

    # ---- streaming Gram accumulation over the feature dimension ----
    # Slab stays in its native dtype (bf16 or f32); MXU accumulates in f32.
    # Contract the last dims of both operands -> no materialized transpose.
    x = x_ref[...]                                            # (n, TK) slab
    gram_acc[...] += lax.dot_general(
        x, x,
        dimension_numbers=(((1,), (1,)), ((), ())),
        preferred_element_type=jnp.float32,
    )

    # ---- epilogue: mining + hinge + mean on the last K slab ----
    @pl.when(k == pl.num_programs(0) - 1)
    def _():
        gram = gram_acc[...]                                   # (n, n) f32

        # Squared norms recovered from the Gram diagonal (no per-step norm work).
        row = lax.broadcasted_iota(jnp.int32, (n, n), 0)
        col = lax.broadcasted_iota(jnp.int32, (n, n), 1)
        diag_vals = jnp.where(row == col, gram, 0.0)
        sq_col = jnp.sum(diag_vals, axis=1, keepdims=True)     # (n, 1)
        sq_row = jnp.sum(diag_vals, axis=0, keepdims=True)     # (1, n) (Gram is symmetric)

        # Pairwise squared distances: ||xi||^2 + ||xj||^2 - 2 xi.xj
        dist2 = sq_col + sq_row - 2.0 * gram                   # (n, n)

        # Same-identity mask via broadcast compare (diagonal included, as in reference).
        mask = tcol_ref[...] == trow_ref[...]                  # (n, n) bool

        neg_inf = jnp.float32(-jnp.inf)
        pos_inf = jnp.float32(jnp.inf)
        # Mine on squared distances (sqrt is monotonic -> same argmax/argmin).
        ap2 = jnp.max(jnp.where(mask, dist2, neg_inf), axis=1, keepdims=True)  # (n, 1)
        an2 = jnp.min(jnp.where(mask, pos_inf, dist2), axis=1, keepdims=True)  # (n, 1)

        # sqrt only on the two mined (n,1) vectors (2n EUP pushes instead of n^2).
        dist_ap = jnp.sqrt(jnp.maximum(ap2, 1e-12))
        dist_an = jnp.sqrt(jnp.maximum(an2, 1e-12))

        # MarginRankingLoss(margin) with y = 1, reduction='mean':
        #   mean(max(0, -(dist_an - dist_ap) + margin))
        hinge = jnp.maximum(dist_ap - dist_an + jnp.float32(margin), 0.0)
        o_ref[0, 0] = jnp.sum(hinge) / jnp.float32(n)


def ori_triplet_loss(inputs, targets, margin=0.3, block_k=None):
    """inputs: (n, feat_dim) float (f32 or bf16); targets: (n,) int labels. Returns scalar."""
    n, d = inputs.shape
    if not jnp.issubdtype(inputs.dtype, jnp.floating):
        inputs = inputs.astype(jnp.float32)
    itemsize = jnp.dtype(inputs.dtype).itemsize

    vmem_cap = _physical_vmem_bytes()

    # Lane/sublane-padded footprint estimates for the VMEM budget.
    n_rows = max(_round_up(n, 8), 8)
    n_lanes = max(_round_up(n, 128), 128)
    nn_pad = n_rows * n_lanes * 4
    # Gram accumulator + ~6 lane-padded (n,n) epilogue temporaries + headroom.
    reserve = 8 * nn_pad + (2 << 20)
    # TODO(synk): for n >~ 1200 on v7x, row-block the epilogue mining so only (tn, n)
    # temporaries are live (and optionally shard rows across the two TensorCores).

    # Auto-size block_k: as large as fits (ideally the whole padded feature dim).
    if block_k is None:
        avail = int(0.8 * vmem_cap) - reserve
        bk_max = max(avail, 0) // (2 * n_rows * itemsize)
        block_k = max(128, min(_round_up(d, 128), (bk_max // 128) * 128))
    block_k = int(block_k)

    num_k = int(pl.cdiv(d, block_k))
    d_pad = num_k * block_k
    if d_pad != d:
        # Zero-padding does not change the Gram matrix or squared norms.
        inputs = jnp.pad(inputs, ((0, 0), (0, d_pad - d)))

    tcol = targets.astype(jnp.int32).reshape(n, 1)
    trow = targets.astype(jnp.int32).reshape(1, n)

    # If several K slabs remain, triple-buffer the streamed slab (exposed DMA on v5e).
    n_buf = 3 if num_k >= 3 else 2
    if n_buf == 3:
        x_spec = pl.BlockSpec((n, block_k), lambda k: (0, k), pipeline_mode=pl.Buffered(3))
    else:
        x_spec = pl.BlockSpec((n, block_k), lambda k: (0, k))

    slab_bytes = n_buf * n_rows * block_k * itemsize
    vmem_limit = min(vmem_cap, max(4 << 20, reserve + slab_bytes + (1 << 20)))

    out = pl.pallas_call(
        functools.partial(_triplet_kernel, float(margin), int(n)),
        out_shape=jax.ShapeDtypeStruct((1, 1), jnp.float32),
        grid_spec=pltpu.PrefetchScalarGridSpec(
            num_scalar_prefetch=0,
            grid=(num_k,),
            in_specs=[
                x_spec,                                       # streamed X slab
                pl.BlockSpec((n, 1), lambda k: (0, 0)),       # targets as column
                pl.BlockSpec((1, n), lambda k: (0, 0)),       # targets as row
            ],
            out_specs=pl.BlockSpec(memory_space=pltpu.MemorySpace.SMEM),
            scratch_shapes=[
                pltpu.VMEM((n, n), jnp.float32),              # Gram accumulator
            ],
        ),
        compiler_params=pltpu.CompilerParams(
            dimension_semantics=("arbitrary",),               # K is a reduction axis
            vmem_limit_bytes=int(vmem_limit),
        ),
    )(inputs, tcol, trow)
    return out[0, 0]


def _reference(inputs, targets, margin=0.3):
    # Pure-JAX reference mirroring the PyTorch module.
    inputs = inputs.astype(jnp.float32)
    sq = jnp.sum(inputs ** 2, axis=1, keepdims=True)
    dist = sq + sq.T - 2.0 * inputs @ inputs.T
    dist = jnp.sqrt(jnp.maximum(dist, 1e-12))
    mask = targets[:, None] == targets[None, :]
    dist_ap = jnp.max(jnp.where(mask, dist, -jnp.inf), axis=1)
    dist_an = jnp.min(jnp.where(mask, jnp.inf, dist), axis=1)
    return jnp.mean(jnp.maximum(dist_ap - dist_an + margin, 0.0))


if __name__ == "__main__":
    key = jax.random.PRNGKey(0)
    n, feat_dim = 8, 256                       # small smoke-test shapes
    inputs = jax.random.normal(key, (n, feat_dim), dtype=jnp.float32)
    # Deterministic labels: 4 identities, 2 samples each.
    targets = jnp.array([0, 0, 1, 1, 2, 2, 3, 3], dtype=jnp.int32)

    loss = ori_triplet_loss(inputs, targets, margin=0.3)
    loss = jax.block_until_ready(loss)

    ref = _reference(inputs, targets, margin=0.3)
    assert jnp.allclose(loss, ref, rtol=1e-5, atol=1e-5), (loss, ref)
    print("KERNEL_OK")
</pallas_src>

<mosaic_0001>
module attributes {stable_mosaic.version = 11 : i64} {
  func.func @_triplet_kernel(%arg0: i32, %arg1: memref<8x256xf32, #tpu.memory_space<vmem>>, %arg2: memref<8x1xi32, #tpu.memory_space<vmem>>, %arg3: memref<1x8xi32, #tpu.memory_space<vmem>>, %arg4: memref<1x1xf32, #tpu.memory_space<smem>>, %arg5: memref<8x8xf32, #tpu.memory_space<vmem>>) attributes {dimension_semantics = [#tpu.dimension_semantics<arbitrary>], iteration_bounds = array<i64: 1>, scalar_prefetch = 0 : i64, scratch_operands = 1 : i64, tpu.core_type = #tpu.core_type<tc>, window_params = [{transform_indices = @transform_0, window_bounds = array<i64: 8, 256>}, {pipeline_mode = #tpu.pipeline_mode<synchronous>, transform_indices = @transform_1, window_bounds = array<i64: 8, 1>}, {pipeline_mode = #tpu.pipeline_mode<synchronous>, transform_indices = @transform_2, window_bounds = array<i64: 1, 8>}, {transform_indices = @transform_3, window_bounds = array<i64: 1, 1>}]} {
    %c0_i32 = arith.constant 0 : i32
    %0 = arith.cmpi eq, %arg0, %c0_i32 : i32
    %1 = arith.extui %0 : i1 to i32
    %c0_i32_0 = arith.constant 0 : i32
    %2 = arith.cmpi ne, %1, %c0_i32_0 : i32
    scf.if %2 {
      %cst_8 = arith.constant 0.000000e+00 : f32
      %11 = vector.broadcast %cst_8 : f32 to vector<8x8xf32>
      %c0_9 = arith.constant 0 : index
      %c0_10 = arith.constant 0 : index
      %12 = vector.load %arg5[%c0_9, %c0_10] : memref<8x8xf32, #tpu.memory_space<vmem>>, vector<8x8xf32>
      tpu.vector_store %arg5[%c0_9, %c0_10], %11 {strides = array<i32>} : memref<8x8xf32, #tpu.memory_space<vmem>>, vector<8x8xf32>,
    } else {
    }
    %c0 = arith.constant 0 : index
    %c0_1 = arith.constant 0 : index
    %3 = vector.load %arg1[%c0, %c0_1] : memref<8x256xf32, #tpu.memory_space<vmem>>, vector<8x256xf32>
    %c0_2 = arith.constant 0 : index
    %c0_3 = arith.constant 0 : index
    %4 = vector.load %arg5[%c0_2, %c0_3] : memref<8x8xf32, #tpu.memory_space<vmem>>, vector<8x8xf32>
    %cst = arith.constant dense<0.000000e+00> : vector<8x8xf32>
    %5 = tpu.matmul %3, %3, %cst {dimension_numbers = #tpu.dot_dimension_numbers<[1], [1], [0], [0], [0, 0, 1, 0], [], []>} : vector<8x256xf32>, vector<8x256xf32>, vector<8x8xf32> -> vector<8x8xf32>
    %6 = arith.addf %4, %5 : vector<8x8xf32>
    %c0_4 = arith.constant 0 : index
    %c0_5 = arith.constant 0 : index
    %7 = vector.load %arg5[%c0_4, %c0_5] : memref<8x8xf32, #tpu.memory_space<vmem>>, vector<8x8xf32>
    tpu.vector_store %arg5[%c0_4, %c0_5], %6 {strides = array<i32>} : memref<8x8xf32, #tpu.memory_space<vmem>>, vector<8x8xf32>,
    %c0_i32_6 = arith.constant 0 : i32
    %8 = arith.cmpi eq, %arg0, %c0_i32_6 : i32
    %9 = arith.extui %8 : i1 to i32
    %c0_i32_7 = arith.constant 0 : i32
    %10 = arith.cmpi ne, %9, %c0_i32_7 : i32
    scf.if %10 {
      %c0_8 = arith.constant 0 : index
      %c0_9 = arith.constant 0 : index
      %11 = vector.load %arg5[%c0_8, %c0_9] : memref<8x8xf32, #tpu.memory_space<vmem>>, vector<8x8xf32>
      %12 = tpu.iota {dimensions = array<i32: 0>} : vector<8x8xi32>
      %13 = tpu.iota {dimensions = array<i32: 1>} : vector<8x8xi32>
      %14 = arith.cmpi eq, %12, %13 : vector<8x8xi32>
      %cst_10 = arith.constant 0.000000e+00 : f32
      %15 = vector.broadcast %cst_10 : f32 to vector<8x8xf32>
      %16 = arith.select %14, %11, %15 : vector<8x8xi1>, vector<8x8xf32>
      %cst_11 = arith.constant dense<0.000000e+00> : vector<8xf32>
      %17 = vector.multi_reduction <add>, %16, %cst_11 [1] : vector<8x8xf32> to vector<8xf32>
      %18 = vector.shape_cast %17 : vector<8xf32> to vector<8x1xf32>
      %cst_12 = arith.constant dense<0.000000e+00> : vector<8xf32>
      %19 = vector.multi_reduction <add>, %16, %cst_12 [0] : vector<8x8xf32> to vector<8xf32>
      %20 = vector.shape_cast %19 : vector<8xf32> to vector<1x8xf32>
      %21 = vector.broadcast %18 : vector<8x1xf32> to vector<8x8xf32>
      %22 = vector.broadcast %20 : vector<1x8xf32> to vector<8x8xf32>
      %23 = arith.addf %21, %22 : vector<8x8xf32>
      %cst_13 = arith.constant 2.000000e+00 : f32
      %24 = vector.broadcast %cst_13 : f32 to vector<8x8xf32>
      %25 = arith.mulf %24, %11 : vector<8x8xf32>
      %26 = arith.subf %23, %25 : vector<8x8xf32>
      %c0_14 = arith.constant 0 : index
      %c0_15 = arith.constant 0 : index
      %27 = vector.load %arg2[%c0_14, %c0_15] : memref<8x1xi32, #tpu.memory_space<vmem>>, vector<8x1xi32>
      %c0_16 = arith.constant 0 : index
      %c0_17 = arith.constant 0 : index
      %28 = vector.load %arg3[%c0_16, %c0_17] : memref<1x8xi32, #tpu.memory_space<vmem>>, vector<1x8xi32>
      %29 = vector.broadcast %27 : vector<8x1xi32> to vector<8x8xi32>
      %30 = vector.broadcast %28 : vector<1x8xi32> to vector<8x8xi32>
      %31 = arith.cmpi eq, %29, %30 : vector<8x8xi32>
      %cst_18 = arith.constant 0xFF800000 : f32
      %32 = vector.broadcast %cst_18 : f32 to vector<8x8xf32>
      %33 = arith.select %31, %26, %32 : vector<8x8xi1>, vector<8x8xf32>
      %cst_19 = arith.constant dense<0xFF800000> : vector<8xf32>
      %34 = vector.multi_reduction <maximumf>, %33, %cst_19 [1] : vector<8x8xf32> to vector<8xf32>
      %35 = vector.shape_cast %34 : vector<8xf32> to vector<8x1xf32>
      %cst_20 = arith.constant 0x7F800000 : f32
      %36 = vector.broadcast %cst_20 : f32 to vector<8x8xf32>
      %37 = arith.select %31, %36, %26 : vector<8x8xi1>, vector<8x8xf32>
      %cst_21 = arith.constant dense<0x7F800000> : vector<8xf32>
      %38 = vector.multi_reduction <minimumf>, %37, %cst_21 [1] : vector<8x8xf32> to vector<8xf32>
      %39 = vector.shape_cast %38 : vector<8xf32> to vector<8x1xf32>
      %cst_22 = arith.constant 9.99999996E-13 : f32
      %40 = vector.broadcast %cst_22 : f32 to vector<8x1xf32>
      %41 = arith.maximumf %35, %40 : vector<8x1xf32>
      %42 = math.sqrt %41 : vector<8x1xf32>
      %cst_23 = arith.constant 9.99999996E-13 : f32
      %43 = vector.broadcast %cst_23 : f32 to vector<8x1xf32>
      %44 = arith.maximumf %39, %43 : vector<8x1xf32>
      %45 = math.sqrt %44 : vector<8x1xf32>
      %46 = arith.subf %42, %45 : vector<8x1xf32>
      %cst_24 = arith.constant 3.000000e-01 : f32
      %47 = vector.broadcast %cst_24 : f32 to vector<8x1xf32>
      %48 = arith.addf %46, %47 : vector<8x1xf32>
      %cst_25 = arith.constant 0.000000e+00 : f32
      %49 = vector.broadcast %cst_25 : f32 to vector<8x1xf32>
      %50 = arith.maximumf %48, %49 : vector<8x1xf32>
      %51 = vector.shape_cast %50 : vector<8x1xf32> to vector<1x8x1xf32>
      %cst_26 = arith.constant dense<0.000000e+00> : vector<1xf32>
      %52 = vector.multi_reduction <add>, %51, %cst_26 [1, 2] : vector<1x8x1xf32> to vector<1xf32>
      %53 = vector.shape_cast %52 : vector<1xf32> to vector<1x1x1xf32>
      %54 = vector.extract %53[0, 0, 0] : f32 from vector<1x1x1xf32>
      %cst_27 = arith.constant 8.000000e+00 : f32
      %55 = arith.divf %54, %cst_27 : f32
      %c0_28 = arith.constant 0 : index
      %c0_29 = arith.constant 0 : index
      %56 = memref.load %arg4[%c0_28, %c0_29] : memref<1x1xf32, #tpu.memory_space<smem>>
      memref.store %55, %arg4[%c0_28, %c0_29] : memref<1x1xf32, #tpu.memory_space<smem>>
    } else {
    }
    return
  }
  func.func @transform_0(%arg0: i32) -> (i32, i32) {
    %c0_i32 = arith.constant 0 : i32
    %c0_i32_0 = arith.constant 0 : i32
    return %c0_i32, %arg0 : i32, i32
  }
  func.func @transform_1(%arg0: i32) -> (i32, i32) {
    %c0_i32 = arith.constant 0 : i32
    %c0_i32_0 = arith.constant 0 : i32
    %c0_i32_1 = arith.constant 0 : i32
    return %c0_i32, %c0_i32_0 : i32, i32
  }
  func.func @transform_2(%arg0: i32) -> (i32, i32) {
    %c0_i32 = arith.constant 0 : i32
    %c0_i32_0 = arith.constant 0 : i32
    %c0_i32_1 = arith.constant 0 : i32
    return %c0_i32, %c0_i32_0 : i32, i32
  }
  func.func @transform_3(%arg0: i32) -> (i32, i32) {
    %c0_i32 = arith.constant 0 : i32
    %c0_i32_0 = arith.constant 0 : i32
    %c0_i32_1 = arith.constant 0 : i32
    return %c0_i32, %c0_i32_0 : i32, i32
  }
}

</mosaic_0001>

<llo_original>
// kernel: tpu_custom_call.1
$region0: #{tpu_custom_call.1}
  #allocation0 [shape = 'u32[]', space=smem, size = 0x4, offset = 0x4, fixed_abs, tag = 'smem constant byte address 0x4 - core index']
  #allocation1 [shape = 'u32[144,128]{1,0:T(1,128)}', space=vmem, size = 0x12000, scoped, tag = 'internal scratch']
  #allocation2 [shape = 'f32[8,8]{1,0:T(8,128)}', space=vmem, size = 0x1000, scoped, tag = 'scratch operand']
  %s0 = inlined_call_operand.hbm [shape: f32[8,256], index: 0, kind: input, shape index: {}]
  %s1 = inlined_call_operand.vmem [shape: s32[8,1], index: 1, kind: input, shape index: {}]
  %s2 = inlined_call_operand.vmem [shape: s32[1,8], index: 2, kind: input, shape index: {}]
  %s3 = inlined_call_operand.hbm [shape: f32[1,1], index: 3, kind: output, shape index: {}]
  %s4 = sld [smem:[#allocation0]]
  $region34: #{tpu_custom_call.1} parent=0
    _
  %s6 = ssub.s32 1, %s4
  %s7 = scalar_select 0, %s6, %s4
  $region1: #{tpu_custom_call.1} parent=0
    #allocation3 [shape = 'u8[8192]{0}', space=vmem, size = 0x2000, scoped, tag = 'input window, operand 0, single buffered']
    #allocation4 [shape = 's32[1]{0}', space=sflag, size = 0x4, scoped, tag = 'scoped memory for tpu_custom_call.1']
    #allocation5 [shape = 's32[1]{0}', space=sflag, size = 0x4, scoped, tag = 'scoped memory for tpu_custom_call.1']
    #allocation6 [shape = 'u8[512]{0}', space=smem, size = 0x200, scoped, tag = 'output window, operand 0, single buffered']
    %8 = vsyncpa [#allocation4], 0
    %9 = vsyncpa [#allocation5], 0
    // Predicated region
    $region2: #{tpu_custom_call.1} parent=1 // pred_check
      _
    $region3: #{tpu_custom_call.1} parent=1 // pred_check_branch
      %11 = sbr.rel (0) target = $region5
    $region4: #{tpu_custom_call.1} parent=1 // pred_region
      %s13 = ssub.s32 256, 256
      %14 = vsyncadd [#allocation4], %s13
      %s16 = sshll.u32 [#allocation3], 4
      %s17 = int_to_ptr.vmem [resolvable:$true] %s16
      %19 = dma.hbm_to_vmem [thread:$0]  %s0, 256, %s17, [#allocation4]
    $region5: #{tpu_custom_call.1} parent=1 // pred_fallthru
      _
    // Predicated region
    $region6: #{tpu_custom_call.1} parent=1 // pred_check
      _
    $region7: #{tpu_custom_call.1} parent=1 // pred_check_branch
      %21 = sbr.rel (0) target = $region9
    $region8: #{tpu_custom_call.1} parent=1 // pred_region
      _
    $region9: #{tpu_custom_call.1} parent=1 // pred_fallthru
      _
    // Predicated region
    $region10: #{tpu_custom_call.1} parent=1 // pred_check
      _
    $region11: #{tpu_custom_call.1} parent=1 // pred_check_branch
      %23 = sbr.rel (0) target = $region13
    $region12: #{tpu_custom_call.1} parent=1 // pred_region
      _
    $region13: #{tpu_custom_call.1} parent=1 // pred_fallthru
      _
    // Predicated region
    $region14: #{tpu_custom_call.1} parent=1 // pred_check
      _
    $region15: #{tpu_custom_call.1} parent=1 // pred_check_branch
      %25 = sbr.rel (0) target = $region17
    $region16: #{tpu_custom_call.1} parent=1 // pred_region
      %26 = dma.done [#allocation4], 256
    $region17: #{tpu_custom_call.1} parent=1 // pred_fallthru
      _
    %p27 = scmp.eq.s32.totalorder 0, 0
    // Predicated region
    $region18: #{tpu_custom_call.1} parent=1 // pred_check
      %p28 = pneg %p27
    $region19: #{tpu_custom_call.1} parent=1 // pred_check_branch
      %30 = sbr.rel (%p28) target = $region21
    $region20: #{tpu_custom_call.1} parent=1 // pred_region
      %vm31 = vcmask 64512
      %32 = vst.msk [vmem:[#allocation2] sm:$0xff] %vm31, 0.0
    $region21: #{tpu_custom_call.1} parent=1 // pred_fallthru
      _
    %v33 = vld [vmem:[#allocation3] sm:$0xff]
    %v34 = vld [vmem:[#allocation3 + $0x8] sm:$0xff]
    %v35 = vld [vmem:[#allocation2] sm:$0xff]
    %36 = vmatprep.subr.mxu0 %v34
    %37 = vmatpush1.xpose.msra.mxu0 %v33
    %38 = vmatprep.subr.mxu0 0.0
    %39 = vmatpush1.xpose.msra.mxu0 0.0
    %40 = vmatprep.subr.mxu0 0.0
    %41 = vmatpush1.xpose.msra.mxu0 0.0
    %42 = vmatprep.subr.mxu0 0.0
    %43 = vmatpush1.xpose.msra.mxu0 0.0
    %44 = vmatprep.subr.mxu0 0.0
    %45 = vmatpush1.xpose.msra.mxu0 0.0
    %46 = vmatprep.subr.mxu0 0.0
    %47 = vmatpush1.xpose.msra.mxu0 0.0
    %48 = vmatprep.subr.mxu0 0.0
    %49 = vmatpush1.xpose.msra.mxu0 0.0
    %50 = vmatprep.subr.mxu0 0.0
    %51 = vmatpush1.xpose.msra.mxu0 0.0
    %52 = vmatprep.subr.mxu0 0.0
    %53 = vmatpush1.xpose.msra.mxu0 0.0
    %54 = vmatprep.subr.mxu0 0.0
    %55 = vmatpush1.xpose.msra.mxu0 0.0
    %56 = vmatprep.subr.mxu0 0.0
    %57 = vmatpush1.xpose.msra.mxu0 0.0
    %58 = vmatprep.subr.mxu0 0.0
    %59 = vmatpush1.xpose.msra.mxu0 0.0
    %60 = vmatprep.subr.mxu0 0.0
    %61 = vmatpush1.xpose.msra.mxu0 0.0
    %62 = vmatprep.subr.mxu0 0.0
    %63 = vmatpush1.xpose.msra.mxu0 0.0
    %64 = vmatprep.subr.mxu0 0.0
    %65 = vmatpush1.xpose.msra.mxu0 0.0
    %66 = vmatprep.subr.mxu0 0.0
    %67 = vmatpush1.xpose.msra.mxu0 0.0
    %68 = vmatprep.subr.mxu0 0.0
    %69 = vmatpush1.xpose.msra.mxu0 0.0
    %70 = vmatprep.subr.mxu0 0.0
    %71 = vmatpush1.xpose.msra.mxu0 0.0
    %72 = vmatprep.subr.mxu0 0.0
    %73 = vmatpush1.xpose.msra.mxu0 0.0
    %74 = vmatprep.subr.mxu0 0.0
    %75 = vmatpush1.xpose.msra.mxu0 0.0
    %76 = vmatprep.subr.mxu0 0.0
    %77 = vmatpush1.xpose.msra.mxu0 0.0
    %78 = vmatprep.subr.mxu0 0.0
    %79 = vmatpush1.xpose.msra.mxu0 0.0
    %80 = vmatprep.subr.mxu0 0.0
    %81 = vmatpush1.xpose.msra.mxu0 0.0
    %82 = vmatprep.subr.mxu0 0.0
    %83 = vmatpush1.xpose.msra.mxu0 0.0
    %84 = vmatprep.subr.mxu0 0.0
    %85 = vmatpush1.xpose.msra.mxu0 0.0
    %86 = vmatprep.subr.mxu0 0.0
    %87 = vmatpush1.xpose.msra.mxu0 0.0
    %88 = vmatprep.subr.mxu0 0.0
    %89 = vmatpush1.xpose.msra.mxu0 0.0
    %90 = vmatprep.subr.mxu0 0.0
    %91 = vmatpush1.xpose.msra.mxu0 0.0
    %92 = vmatprep.subr.mxu0 0.0
    %93 = vmatpush1.xpose.msra.mxu0 0.0
    %94 = vmatprep.subr.mxu0 0.0
    %95 = vmatpush1.xpose.msra.mxu0 0.0
    %96 = vmatprep.subr.mxu0 0.0
    %97 = vmatpush1.xpose.msra.mxu0 0.0
    %98 = vmatprep.subr.mxu0 0.0
    %99 = vmatpush1.xpose.msra.mxu0 0.0
    %100 = vmatprep.mubr.f32.mxu0 %v34
    %101 = vmatmul.mubr.f32.gmra.mrb[0].mxu0 %v33
    %v102 = vpop.f32.mrb[0].mxu0
    %v103 = vadd.f32 0.0, %v102
    %v104 = vpop.f32.mrb[0].mxu0
    %105 = vdwg.mxu0
    %v106 = vadd.f32 %v35, %v103
    %vm107 = vcmask 64512
    %108 = vst.msk [vmem:[#allocation2] sm:$0xff] %vm107, %v106
    // Predicated region
    $region22: #{tpu_custom_call.1} parent=1 // pred_check
      %p109 = pneg %p27
    $region23: #{tpu_custom_call.1} parent=1 // pred_check_branch
      %111 = sbr.rel (%p109) target = $region25
    $region24: #{tpu_custom_call.1} parent=1 // pred_region
      %v112 = vld [vmem:[#allocation2] sm:$0xff]
      %v113 = vlaneseq
      %v114 = vshrl.u32 %v113, 7
      %v115 = vlaneseq
      %v116 = vand.u32 %v115, 127
      %vm117 = vcmp.eq.s32.totalorder %v114, %v116
      %v118 = vsel %vm117, %v112, 0.0
      %v119 = vsel %vm107, %v118, 0.0
      %120 = vadd.xlane.f32.xlu0 %v119
      %v121 = vpop.xlane.xlu0 %120
      %v122 = vrot.slane %v119, 4
      %v123 = vadd.f32 %v119, %v122
      %v124 = vrot.slane %v123, 2
      %v125 = vadd.f32 %v123, %v124
      %v126 = vrot.slane %v125, 1
      %v127 = vadd.f32 %v125, %v126
      %v128 = vadd.f32 %v121, %v127
      %v129 = vmul.f32 %v112, 2.0
      %v130 = vsub.f32 %v128, %v129
      %v131 = vld [vmem:[%s1] sm:$0xff]
      %v132 = vld [vmem:[%s2] sm:$0x1]
      %133 = vset.pattern.permute.xlu0 0
      %134 = vperm.xlu0 %133, %v131
      %v135 = vpop.permute.xlu0 %134
      %v136 = vlaneseq
      %v137 = vshrl.u32 %v136, 7
      %v138 = vsub.s32 0, %v137
      %v139 = vrot.slane %v132, %v138
      %vm140 = vcmp.eq.s32.totalorder %v135, %v139
      %v141 = vsel %vm140, %v130, -inf
      %v142 = vsel %vm107, %v141, -inf
      %143 = vmax.xlane.f32.xlu0 %v142
      %v144 = vpop.xlane.xlu0 %143
      %v145 = vsel %vm140, inf, %v130
      %v146 = vsel %vm107, %v145, inf
      %147 = vmin.xlane.f32.xlu0 %v146
      %v148 = vpop.xlane.xlu0 %147
      %v149 = vmax.f32 %v144, 1e-12
      %v150 = vrsqrt.pop %v149
      %v151 = vmul.f32 %v149, %v150
      %vm152 = vcmp.eq.f32.partialorder %v149, inf
      %v153 = vsel %vm152, %v149, %v151
      %vm154 = vcmp.eq.f32.partialorder %v149, 0.0
      %v155 = vand.u32 %v149, 2147483648
      %v156 = vsel %vm154, %v155, %v153
      %v157 = vmax.f32 %v148, 1e-12
      %v158 = vrsqrt.pop %v157
      %v159 = vmul.f32 %v157, %v158
      %vm160 = vcmp.eq.f32.partialorder %v157, inf
      %v161 = vsel %vm160, %v157, %v159
      %vm162 = vcmp.eq.f32.partialorder %v157, 0.0
      %v163 = vand.u32 %v157, 2147483648
      %v164 = vsel %vm162, %v163, %v161
      %v165 = vsub.f32 %v156, %v164
      %v166 = vadd.f32 %v165, 0.3
      %v167 = vmax.f32 %v166, 0.0
      %vm168 = vcmask 7168
      %v169 = vsel %vm168, %v167, 0.0
      %170 = vadd.xlane.f32.xlu0 %v169
      %v171 = vpop.xlane.xlu0 %170
      %v172 = vrot.slane %v171, 4
      %v173 = vadd.f32 %v171, %v172
      %v174 = vrot.slane %v173, 2
      %v175 = vadd.f32 %v173, %v174
      %v176 = vrot.slane %v175, 1
      %v177 = vadd.f32 %v175, %v176
      %s178 = vtos %v177
      %v179 = vrcp.pop 8.0
      %s180 = vtos %v179
      %s181 = smul.f32 %s178, %s180
      %s182 = scalar_lea.smem [#allocation6], 0
      %183 = sst [smem:[%s182]] %s181
    $region25: #{tpu_custom_call.1} parent=1 // pred_fallthru
      _
    // Predicated region
    $region26: #{tpu_custom_call.1} parent=1 // pred_check
      _
    $region27: #{tpu_custom_call.1} parent=1 // pred_check_branch
      %185 = sbr.rel (0) target = $region29
    $region28: #{tpu_custom_call.1} parent=1 // pred_region
      %s187 = ssub.s32 16, 16
      %188 = vsyncadd [#allocation5], %s187
      %191 = dma.smem_to_hbm [#allocation6], 16, %s3, [#allocation5]
    $region29: #{tpu_custom_call.1} parent=1 // pred_fallthru
      _
    // Predicated region
    $region30: #{tpu_custom_call.1} parent=1 // pred_check
      _
    $region31: #{tpu_custom_call.1} parent=1 // pred_check_branch
      %193 = sbr.rel (0) target = $region33
    $region32: #{tpu_custom_call.1} parent=1 // pred_region
      %194 = dma.done [#allocation5], 16
    $region33: #{tpu_custom_call.1} parent=1 // pred_fallthru
      _
    %195 = sfence
    %196 = vsyncpa [#allocation4], 1
    %197 = vsyncpa [#allocation5], 1

</llo_original>
